<compile_context>
chip_gen: v7x
topology: tpu7x:2x2x1
jax: 0.10.0
libtpu: 0.0.40
codegen_flags: <defaults>
</compile_context>

<pallas_src>
import math

import jax
import jax.numpy as jnp
from jax.experimental import pallas as pl
from jax.experimental.pallas import tpu as pltpu

# ----- CONFIG (small, consistent with the module) -----
NUM_CLS = 4
SIZE = (128, 128)
SCALE = 0.125

LN_EPS = 1e-5
BN_EPS = 1e-5


def _relu6(x):
    return jnp.clip(x, 0.0, 6.0)


def global_energy_kernel(scal_ref, feat_ref, rowp_ref, out_ref):
    """One batch tile of the fused global_energy forward (flattened layout).

    scal_ref : (NS,) f32 SMEM   BN-folded 1x1-conv weights/bias + hoisted LN stats
    feat_ref : (BT, C*HW)       input tile (any float dtype; upcast in-kernel)
    rowp_ref : (8, HW) f32      [colsum_avg, b_avg, g_avg, be_avg,
                                 colsum_max, b_max, g_max, be_max]
    out_ref  : (BT, C*HW)       output tile (same dtype as input)
    """
    hw = rowp_ref.shape[1]
    c = feat_ref.shape[1] // hw
    inv_n = 1.0 / float(c * hw)

    # ---- adaptive_avg_pool3d / adaptive_max_pool3d over (1, C, H*W) per batch
    # item.  One pass over contiguous lane slices; accumulators are (BT, 1).
    s_acc = None
    m_acc = None
    for ci in range(c):
        xc = feat_ref[:, ci * hw:(ci + 1) * hw].astype(jnp.float32)   # (BT, HW)
        sc = jnp.sum(xc, axis=1, keepdims=True)
        mc = jnp.max(xc, axis=1, keepdims=True)
        s_acc = sc if ci == 0 else s_acc + sc
        m_acc = mc if ci == 0 else jnp.maximum(m_acc, mc)
    mean_all = s_acc * inv_n                                          # (BT, 1)
    max_all = m_acc                                                   # (BT, 1)

    # scalar-table offsets (static python ints)
    off_wf = 0                # (C, C) feat columns of the folded 1x1 conv
    off_wa = c * c            # (C,)   avg column
    off_wm = off_wa + c       # (C,)   max column
    off_bc = off_wm + c       # (C,)   folded bias
    off_ln_avg = off_bc + c   # 5 hoisted LayerNorm stats, avg branch
    off_ln_max = off_ln_avg + 5

    def upsample(s, row0, ln_off):
        # Linear(d, HW) applied to d identical pooled scalars == s*colsum(W) + b
        cs = rowp_ref[row0 + 0:row0 + 1, :]                           # (1, HW)
        b = rowp_ref[row0 + 1:row0 + 2, :]
        g = rowp_ref[row0 + 2:row0 + 3, :]
        be = rowp_ref[row0 + 3:row0 + 4, :]
        # LayerNorm stats of y = s*cs + b from precomputed scalars (no XLU reduce):
        #   mean(y) = s*mean(cs) + mean(b)
        #   var(y)  = s^2*var(cs) + 2*s*cov(cs,b) + var(b)
        cs_m = scal_ref[ln_off + 0]
        b_m = scal_ref[ln_off + 1]
        cs_v = scal_ref[ln_off + 2]
        cov = scal_ref[ln_off + 3]
        b_v = scal_ref[ln_off + 4]
        mu = s * cs_m + b_m                                           # (BT, 1)
        var = s * s * cs_v + 2.0 * s * cov + b_v                      # (BT, 1)
        inv = jax.lax.rsqrt(var + LN_EPS)                             # (BT, 1)
        y = s * cs + b                                                # (BT, HW)
        return _relu6((y - mu) * inv * g + be)                        # (BT, HW)

    avg_up = upsample(mean_all, 0, off_ln_avg)
    max_up = upsample(max_all, 4, off_ln_max)

    # ---- 1x1 conv over concat([avg, max, feat], channel) with BN pre-folded,
    # done as pure-VPU FMAs (no MXU).  Each output channel is stored directly
    # as a full lane slice (no jnp.stack / relayout); channel slices of the
    # input are re-read from the VMEM tile to keep vreg pressure bounded.
    out_dtype = out_ref.dtype
    for k in range(c):
        acc = (scal_ref[off_bc + k]
               + scal_ref[off_wa + k] * avg_up
               + scal_ref[off_wm + k] * max_up)
        for ci in range(c):
            xc = feat_ref[:, ci * hw:(ci + 1) * hw].astype(jnp.float32)
            acc = acc + scal_ref[off_wf + k * c + ci] * xc
        out_ref[:, k * hw:(k + 1) * hw] = _relu6(acc).astype(out_dtype)


def _pack_params(p):
    """Fold BN into the 1x1 conv, collapse the Linear weights to column sums,
    hoist the LayerNorm statistics, and pack everything into two arrays."""
    cs_avg = jnp.sum(p["w_avg"], axis=0, keepdims=True)           # (1, HW)
    cs_max = jnp.sum(p["w_max"], axis=0, keepdims=True)           # (1, HW)
    rowp = jnp.concatenate(
        [cs_avg, p["b_avg"], p["g_avg"], p["be_avg"],
         cs_max, p["b_max"], p["g_max"], p["be_max"]], axis=0).astype(jnp.float32)

    # BatchNorm2d(C) eval-mode fold: y = (Wx+b)*scale + shift == (scale*W)x + (scale*b+shift)
    scale = p["bn_gamma"] / jnp.sqrt(p["bn_var"] + BN_EPS)        # (C,)
    shift = p["bn_beta"] - p["bn_mean"] * scale
    wc = p["wc"]                                                  # (C, 2+C): [avg | max | feat]
    wa = wc[:, 0] * scale
    wm = wc[:, 1] * scale
    wf = wc[:, 2:] * scale[:, None]
    bc = p["bc"] * scale + shift

    def ln_stats(cs, b):
        cs = cs[0]
        b = b[0]
        cs_m = jnp.mean(cs)
        b_m = jnp.mean(b)
        return jnp.stack([cs_m, b_m,
                          jnp.mean((cs - cs_m) ** 2),
                          jnp.mean((cs - cs_m) * (b - b_m)),
                          jnp.mean((b - b_m) ** 2)])

    scal = jnp.concatenate(
        [wf.reshape(-1), wa, wm, bc,
         ln_stats(cs_avg, p["b_avg"]),
         ln_stats(cs_max, p["b_max"])]).astype(jnp.float32)
    return scal, rowp


def _pick_batch_tile(B, row_bytes, budget_bytes=512 * 1024):
    """Largest batch tile that (a) fits the per-tile byte budget, (b) divides B
    (no padding / no output slice copy), and (c) is a multiple of 8 sublanes
    unless it spans the whole batch."""
    cap = max(1, budget_bytes // max(row_bytes, 1))
    if B <= cap:
        return B                      # single grid step for small batches
    bt = (min(cap, B) // 8) * 8
    while bt >= 8:
        if B % bt == 0:
            return bt
        bt -= 8
    return B                          # no aligned divisor: one full-batch tile


def global_energy_forward(feat, params):
    B, C, H, W = feat.shape
    HW = H * W
    CHW = C * HW
    # Lane-major flatten; keep the caller's dtype (bf16 stays bf16 on the wire).
    x = feat.reshape(B, CHW)
    scal, rowp = _pack_params(params)

    in_bytes = jnp.dtype(x.dtype).itemsize
    BT = _pick_batch_tile(B, CHW * in_bytes)
    G = B // BT                       # BT divides B by construction

    # Explicit VMEM budget: double-buffered in+out tiles + the shared (8,HW)
    # param slab + headroom.  Kept well under the v7x 64 MiB physical ceiling.
    tile_bytes = BT * CHW * in_bytes
    vmem_limit = int(min(48 << 20,
                         max(8 << 20,
                             4 * tile_bytes + 2 * rowp.size * 4 + (2 << 20))))

    cost = pl.CostEstimate(
        flops=int(B * HW * (2 * C + 12 + 2 * C * (C + 2))),
        transcendentals=int(2 * B),
        bytes_accessed=int(2 * B * CHW * in_bytes + rowp.size * 4 + scal.size * 4),
    )

    out = pl.pallas_call(
        global_energy_kernel,
        out_shape=jax.ShapeDtypeStruct((B, CHW), x.dtype),
        grid_spec=pltpu.PrefetchScalarGridSpec(
            num_scalar_prefetch=0,
            grid=(G,),
            in_specs=[
                pl.BlockSpec(memory_space=pltpu.MemorySpace.SMEM),   # packed scalars
                pl.BlockSpec((BT, CHW), lambda i: (i, 0)),           # feat batch tile
                # Constant index_map: same 8 KiB block every step (no re-fetch
                # of new data across the grid).
                pl.BlockSpec((8, HW), lambda i: (0, 0)),
            ],
            out_specs=pl.BlockSpec((BT, CHW), lambda i: (i, 0)),
        ),
        compiler_params=pltpu.CompilerParams(
            dimension_semantics=("parallel",),
            vmem_limit_bytes=vmem_limit),
        cost_estimate=cost,
    )(scal, x, rowp)
    return out.reshape(B, C, H, W)


def init_params(key, C, H, W):
    HW = H * W
    d = int(math.sqrt(HW) / 2)
    ks = jax.random.split(key, 6)
    params = dict(
        # Linear(d, HW) weights stored transposed as (d, HW)
        w_avg=jax.random.normal(ks[0], (d, HW), jnp.float32) * 0.1,
        b_avg=jax.random.normal(ks[1], (1, HW), jnp.float32) * 0.1,
        w_max=jax.random.normal(ks[2], (d, HW), jnp.float32) * 0.1,
        b_max=jax.random.normal(ks[3], (1, HW), jnp.float32) * 0.1,
        # LayerNorm(HW) default init
        g_avg=jnp.ones((1, HW), jnp.float32),
        be_avg=jnp.zeros((1, HW), jnp.float32),
        g_max=jnp.ones((1, HW), jnp.float32),
        be_max=jnp.zeros((1, HW), jnp.float32),
        # Conv2d(2+C, C, kernel 1): columns ordered [avg | max | feat]
        wc=jax.random.normal(ks[4], (C, 2 + C), jnp.float32) * 0.2,
        bc=jax.random.normal(ks[5], (C,), jnp.float32) * 0.1,
        # BatchNorm2d(C) eval mode, default init
        bn_gamma=jnp.ones((C,), jnp.float32),
        bn_beta=jnp.zeros((C,), jnp.float32),
        bn_mean=jnp.zeros((C,), jnp.float32),
        bn_var=jnp.ones((C,), jnp.float32),
    )
    return params, d


def reference_forward(feat, p):
    # pure-JAX reference of the same (eval-mode) forward pass, unfolded
    B, C, H, W = feat.shape
    HW = H * W
    d = p["w_avg"].shape[0]
    x = feat.reshape(B, C, HW)
    m = jnp.mean(x, axis=(1, 2))
    M = jnp.max(x, axis=(1, 2))

    def up(s, w, b, g, be):
        vec = jnp.broadcast_to(s[:, None], (B, d))
        y = jnp.dot(vec, w, precision=jax.lax.Precision.HIGHEST) + b
        mu = jnp.mean(y, -1, keepdims=True)
        var = jnp.mean((y - mu) ** 2, -1, keepdims=True)
        yn = (y - mu) / jnp.sqrt(var + LN_EPS) * g + be
        return jnp.clip(yn, 0.0, 6.0)

    avg = up(m, p["w_avg"], p["b_avg"], p["g_avg"], p["be_avg"])
    mx = up(M, p["w_max"], p["b_max"], p["g_max"], p["be_max"])
    cat = jnp.concatenate([avg[:, None, :], mx[:, None, :], x], axis=1)  # (B, 2+C, HW)
    conv = jnp.einsum("kc,bcp->bkp", p["wc"], cat,
                      precision=jax.lax.Precision.HIGHEST) + p["bc"][None, :, None]
    scale = p["bn_gamma"] / jnp.sqrt(p["bn_var"] + BN_EPS)
    shift = p["bn_beta"] - p["bn_mean"] * scale
    conv = conv * scale[None, :, None] + shift[None, :, None]
    return jnp.clip(conv, 0.0, 6.0).reshape(B, C, H, W)


if __name__ == "__main__":
    B = 2
    C = NUM_CLS
    H = int(SIZE[0] * SCALE)   # 16
    W = int(SIZE[1] * SCALE)   # 16

    feat = jax.random.normal(jax.random.PRNGKey(0), (B, C, H, W), jnp.float32)
    params, d = init_params(jax.random.PRNGKey(1), C, H, W)

    out = jax.block_until_ready(global_energy_forward(feat, params))

    ref = reference_forward(feat, params)
    assert out.shape == (B, C, H, W)
    assert jnp.allclose(out, ref, rtol=1e-3, atol=1e-3), "mismatch vs reference"

    # TODO(synk): DSConv's internal Conv2d+BatchNorm+ReLU6 branch is dead code in
    # the PyTorch module (its output is never returned), so it is not implemented.
    print("KERNEL_OK")
</pallas_src>

<mosaic_0001>
module attributes {stable_mosaic.version = 11 : i64} {
  func.func @global_energy_kernel(%arg0: i32, %arg1: memref<38xf32, #tpu.memory_space<smem>>, %arg2: memref<2x1024xf32, #tpu.memory_space<vmem>>, %arg3: memref<8x256xf32, #tpu.memory_space<vmem>>, %arg4: memref<2x1024xf32, #tpu.memory_space<vmem>>) attributes {dimension_semantics = [#tpu.dimension_semantics<parallel>], iteration_bounds = array<i64: 1>, scalar_prefetch = 0 : i64, scratch_operands = 0 : i64, tpu.core_type = #tpu.core_type<tc>, window_params = [{transform_indices = @transform_0, window_bounds = array<i64: 38>}, {transform_indices = @transform_1, window_bounds = array<i64: 2, 1024>}, {pipeline_mode = #tpu.pipeline_mode<synchronous>, transform_indices = @transform_2, window_bounds = array<i64: 8, 256>}, {transform_indices = @transform_3, window_bounds = array<i64: 2, 1024>}]} {
    %c0 = arith.constant 0 : index
    %c0_0 = arith.constant 0 : index
    %0 = vector.load %arg2[%c0, %c0_0] : memref<2x1024xf32, #tpu.memory_space<vmem>>, vector<2x256xf32>
    %cst = arith.constant dense<0.000000e+00> : vector<2xf32>
    %1 = vector.multi_reduction <add>, %0, %cst [1] : vector<2x256xf32> to vector<2xf32>
    %2 = vector.shape_cast %1 : vector<2xf32> to vector<2x1xf32>
    %cst_1 = arith.constant dense<0xFF800000> : vector<2xf32>
    %3 = vector.multi_reduction <maximumf>, %0, %cst_1 [1] : vector<2x256xf32> to vector<2xf32>
    %4 = vector.shape_cast %3 : vector<2xf32> to vector<2x1xf32>
    %c0_2 = arith.constant 0 : index
    %c256 = arith.constant 256 : index
    %5 = vector.load %arg2[%c0_2, %c256] : memref<2x1024xf32, #tpu.memory_space<vmem>>, vector<2x256xf32>
    %cst_3 = arith.constant dense<0.000000e+00> : vector<2xf32>
    %6 = vector.multi_reduction <add>, %5, %cst_3 [1] : vector<2x256xf32> to vector<2xf32>
    %7 = vector.shape_cast %6 : vector<2xf32> to vector<2x1xf32>
    %cst_4 = arith.constant dense<0xFF800000> : vector<2xf32>
    %8 = vector.multi_reduction <maximumf>, %5, %cst_4 [1] : vector<2x256xf32> to vector<2xf32>
    %9 = vector.shape_cast %8 : vector<2xf32> to vector<2x1xf32>
    %10 = arith.addf %2, %7 : vector<2x1xf32>
    %11 = arith.maximumf %4, %9 : vector<2x1xf32>
    %c0_5 = arith.constant 0 : index
    %c512 = arith.constant 512 : index
    %12 = vector.load %arg2[%c0_5, %c512] : memref<2x1024xf32, #tpu.memory_space<vmem>>, vector<2x256xf32>
    %cst_6 = arith.constant dense<0.000000e+00> : vector<2xf32>
    %13 = vector.multi_reduction <add>, %12, %cst_6 [1] : vector<2x256xf32> to vector<2xf32>
    %14 = vector.shape_cast %13 : vector<2xf32> to vector<2x1xf32>
    %cst_7 = arith.constant dense<0xFF800000> : vector<2xf32>
    %15 = vector.multi_reduction <maximumf>, %12, %cst_7 [1] : vector<2x256xf32> to vector<2xf32>
    %16 = vector.shape_cast %15 : vector<2xf32> to vector<2x1xf32>
    %17 = arith.addf %10, %14 : vector<2x1xf32>
    %18 = arith.maximumf %11, %16 : vector<2x1xf32>
    %c0_8 = arith.constant 0 : index
    %c768 = arith.constant 768 : index
    %19 = vector.load %arg2[%c0_8, %c768] : memref<2x1024xf32, #tpu.memory_space<vmem>>, vector<2x256xf32>
    %cst_9 = arith.constant dense<0.000000e+00> : vector<2xf32>
    %20 = vector.multi_reduction <add>, %19, %cst_9 [1] : vector<2x256xf32> to vector<2xf32>
    %21 = vector.shape_cast %20 : vector<2xf32> to vector<2x1xf32>
    %cst_10 = arith.constant dense<0xFF800000> : vector<2xf32>
    %22 = vector.multi_reduction <maximumf>, %19, %cst_10 [1] : vector<2x256xf32> to vector<2xf32>
    %23 = vector.shape_cast %22 : vector<2xf32> to vector<2x1xf32>
    %24 = arith.addf %17, %21 : vector<2x1xf32>
    %25 = arith.maximumf %18, %23 : vector<2x1xf32>
    %cst_11 = arith.constant 9.765625E-4 : f32
    %26 = vector.broadcast %cst_11 : f32 to vector<2x1xf32>
    %27 = arith.mulf %24, %26 : vector<2x1xf32>
    %c0_12 = arith.constant 0 : index
    %c0_13 = arith.constant 0 : index
    %28 = vector.load %arg3[%c0_12, %c0_13] : memref<8x256xf32, #tpu.memory_space<vmem>>, vector<1x256xf32>
    %c1 = arith.constant 1 : index
    %c0_14 = arith.constant 0 : index
    %29 = vector.load %arg3[%c1, %c0_14] : memref<8x256xf32, #tpu.memory_space<vmem>>, vector<1x256xf32>
    %c2 = arith.constant 2 : index
    %c0_15 = arith.constant 0 : index
    %30 = vector.load %arg3[%c2, %c0_15] : memref<8x256xf32, #tpu.memory_space<vmem>>, vector<1x256xf32>
    %c3 = arith.constant 3 : index
    %c0_16 = arith.constant 0 : index
    %31 = vector.load %arg3[%c3, %c0_16] : memref<8x256xf32, #tpu.memory_space<vmem>>, vector<1x256xf32>
    %c28 = arith.constant 28 : index
    %32 = memref.load %arg1[%c28] : memref<38xf32, #tpu.memory_space<smem>>
    %c29 = arith.constant 29 : index
    %33 = memref.load %arg1[%c29] : memref<38xf32, #tpu.memory_space<smem>>
    %c30 = arith.constant 30 : index
    %34 = memref.load %arg1[%c30] : memref<38xf32, #tpu.memory_space<smem>>
    %c31 = arith.constant 31 : index
    %35 = memref.load %arg1[%c31] : memref<38xf32, #tpu.memory_space<smem>>
    %c32 = arith.constant 32 : index
    %36 = memref.load %arg1[%c32] : memref<38xf32, #tpu.memory_space<smem>>
    %37 = vector.broadcast %32 : f32 to vector<2x1xf32>
    %38 = arith.mulf %27, %37 : vector<2x1xf32>
    %39 = vector.broadcast %33 : f32 to vector<2x1xf32>
    %40 = arith.addf %38, %39 : vector<2x1xf32>
    %41 = arith.mulf %27, %27 : vector<2x1xf32>
    %42 = vector.broadcast %34 : f32 to vector<2x1xf32>
    %43 = arith.mulf %41, %42 : vector<2x1xf32>
    %cst_17 = arith.constant 2.000000e+00 : f32
    %44 = vector.broadcast %cst_17 : f32 to vector<2x1xf32>
    %45 = arith.mulf %44, %27 : vector<2x1xf32>
    %46 = vector.broadcast %35 : f32 to vector<2x1xf32>
    %47 = arith.mulf %45, %46 : vector<2x1xf32>
    %48 = arith.addf %43, %47 : vector<2x1xf32>
    %49 = vector.broadcast %36 : f32 to vector<2x1xf32>
    %50 = arith.addf %48, %49 : vector<2x1xf32>
    %cst_18 = arith.constant 9.99999974E-6 : f32
    %51 = vector.broadcast %cst_18 : f32 to vector<2x1xf32>
    %52 = arith.addf %50, %51 : vector<2x1xf32>
    %53 = math.rsqrt %52 : vector<2x1xf32>
    %54 = vector.broadcast %27 : vector<2x1xf32> to vector<2x256xf32>
    %55 = vector.broadcast %28 : vector<1x256xf32> to vector<2x256xf32>
    %56 = arith.mulf %54, %55 : vector<2x256xf32>
    %57 = vector.broadcast %29 : vector<1x256xf32> to vector<2x256xf32>
    %58 = arith.addf %56, %57 : vector<2x256xf32>
    %59 = vector.broadcast %40 : vector<2x1xf32> to vector<2x256xf32>
    %60 = arith.subf %58, %59 : vector<2x256xf32>
    %61 = vector.broadcast %53 : vector<2x1xf32> to vector<2x256xf32>
    %62 = arith.mulf %60, %61 : vector<2x256xf32>
    %63 = vector.broadcast %30 : vector<1x256xf32> to vector<2x256xf32>
    %64 = arith.mulf %62, %63 : vector<2x256xf32>
    %65 = vector.broadcast %31 : vector<1x256xf32> to vector<2x256xf32>
    %66 = arith.addf %64, %65 : vector<2x256xf32>
    %cst_19 = arith.constant 0.000000e+00 : f32
    %cst_20 = arith.constant 6.000000e+00 : f32
    %67 = vector.broadcast %cst_19 : f32 to vector<2x256xf32>
    %68 = arith.maximumf %67, %66 : vector<2x256xf32>
    %69 = vector.broadcast %cst_20 : f32 to vector<2x256xf32>
    %70 = arith.minimumf %69, %68 : vector<2x256xf32>
    %c4 = arith.constant 4 : index
    %c0_21 = arith.constant 0 : index
    %71 = vector.load %arg3[%c4, %c0_21] : memref<8x256xf32, #tpu.memory_space<vmem>>, vector<1x256xf32>
    %c5 = arith.constant 5 : index
    %c0_22 = arith.constant 0 : index
    %72 = vector.load %arg3[%c5, %c0_22] : memref<8x256xf32, #tpu.memory_space<vmem>>, vector<1x256xf32>
    %c6 = arith.constant 6 : index
    %c0_23 = arith.constant 0 : index
    %73 = vector.load %arg3[%c6, %c0_23] : memref<8x256xf32, #tpu.memory_space<vmem>>, vector<1x256xf32>
    %c7 = arith.constant 7 : index
    %c0_24 = arith.constant 0 : index
    %74 = vector.load %arg3[%c7, %c0_24] : memref<8x256xf32, #tpu.memory_space<vmem>>, vector<1x256xf32>
    %c33 = arith.constant 33 : index
    %75 = memref.load %arg1[%c33] : memref<38xf32, #tpu.memory_space<smem>>
    %c34 = arith.constant 34 : index
    %76 = memref.load %arg1[%c34] : memref<38xf32, #tpu.memory_space<smem>>
    %c35 = arith.constant 35 : index
    %77 = memref.load %arg1[%c35] : memref<38xf32, #tpu.memory_space<smem>>
    %c36 = arith.constant 36 : index
    %78 = memref.load %arg1[%c36] : memref<38xf32, #tpu.memory_space<smem>>
    %c37 = arith.constant 37 : index
    %79 = memref.load %arg1[%c37] : memref<38xf32, #tpu.memory_space<smem>>
    %80 = vector.broadcast %75 : f32 to vector<2x1xf32>
    %81 = arith.mulf %25, %80 : vector<2x1xf32>
    %82 = vector.broadcast %76 : f32 to vector<2x1xf32>
    %83 = arith.addf %81, %82 : vector<2x1xf32>
    %84 = arith.mulf %25, %25 : vector<2x1xf32>
    %85 = vector.broadcast %77 : f32 to vector<2x1xf32>
    %86 = arith.mulf %84, %85 : vector<2x1xf32>
    %cst_25 = arith.constant 2.000000e+00 : f32
    %87 = vector.broadcast %cst_25 : f32 to vector<2x1xf32>
    %88 = arith.mulf %87, %25 : vector<2x1xf32>
    %89 = vector.broadcast %78 : f32 to vector<2x1xf32>
    %90 = arith.mulf %88, %89 : vector<2x1xf32>
    %91 = arith.addf %86, %90 : vector<2x1xf32>
    %92 = vector.broadcast %79 : f32 to vector<2x1xf32>
    %93 = arith.addf %91, %92 : vector<2x1xf32>
    %cst_26 = arith.constant 9.99999974E-6 : f32
    %94 = vector.broadcast %cst_26 : f32 to vector<2x1xf32>
    %95 = arith.addf %93, %94 : vector<2x1xf32>
    %96 = math.rsqrt %95 : vector<2x1xf32>
    %97 = vector.broadcast %25 : vector<2x1xf32> to vector<2x256xf32>
    %98 = vector.broadcast %71 : vector<1x256xf32> to vector<2x256xf32>
    %99 = arith.mulf %97, %98 : vector<2x256xf32>
    %100 = vector.broadcast %72 : vector<1x256xf32> to vector<2x256xf32>
    %101 = arith.addf %99, %100 : vector<2x256xf32>
    %102 = vector.broadcast %83 : vector<2x1xf32> to vector<2x256xf32>
    %103 = arith.subf %101, %102 : vector<2x256xf32>
    %104 = vector.broadcast %96 : vector<2x1xf32> to vector<2x256xf32>
    %105 = arith.mulf %103, %104 : vector<2x256xf32>
    %106 = vector.broadcast %73 : vector<1x256xf32> to vector<2x256xf32>
    %107 = arith.mulf %105, %106 : vector<2x256xf32>
    %108 = vector.broadcast %74 : vector<1x256xf32> to vector<2x256xf32>
    %109 = arith.addf %107, %108 : vector<2x256xf32>
    %cst_27 = arith.constant 0.000000e+00 : f32
    %cst_28 = arith.constant 6.000000e+00 : f32
    %110 = vector.broadcast %cst_27 : f32 to vector<2x256xf32>
    %111 = arith.maximumf %110, %109 : vector<2x256xf32>
    %112 = vector.broadcast %cst_28 : f32 to vector<2x256xf32>
    %113 = arith.minimumf %112, %111 : vector<2x256xf32>
    %c24 = arith.constant 24 : index
    %114 = memref.load %arg1[%c24] : memref<38xf32, #tpu.memory_space<smem>>
    %c16 = arith.constant 16 : index
    %115 = memref.load %arg1[%c16] : memref<38xf32, #tpu.memory_space<smem>>
    %116 = vector.broadcast %115 : f32 to vector<2x256xf32>
    %117 = arith.mulf %116, %70 : vector<2x256xf32>
    %118 = vector.broadcast %114 : f32 to vector<2x256xf32>
    %119 = arith.addf %118, %117 : vector<2x256xf32>
    %c20 = arith.constant 20 : index
    %120 = memref.load %arg1[%c20] : memref<38xf32, #tpu.memory_space<smem>>
    %121 = vector.broadcast %120 : f32 to vector<2x256xf32>
    %122 = arith.mulf %121, %113 : vector<2x256xf32>
    %123 = arith.addf %119, %122 : vector<2x256xf32>
    %c0_29 = arith.constant 0 : index
    %c0_30 = arith.constant 0 : index
    %124 = vector.load %arg2[%c0_29, %c0_30] : memref<2x1024xf32, #tpu.memory_space<vmem>>, vector<2x256xf32>
    %c0_31 = arith.constant 0 : index
    %125 = memref.load %arg1[%c0_31] : memref<38xf32, #tpu.memory_space<smem>>
    %126 = vector.broadcast %125 : f32 to vector<2x256xf32>
    %127 = arith.mulf %126, %124 : vector<2x256xf32>
    %128 = arith.addf %123, %127 : vector<2x256xf32>
    %c0_32 = arith.constant 0 : index
    %c256_33 = arith.constant 256 : index
    %129 = vector.load %arg2[%c0_32, %c256_33] : memref<2x1024xf32, #tpu.memory_space<vmem>>, vector<2x256xf32>
    %c1_34 = arith.constant 1 : index
    %130 = memref.load %arg1[%c1_34] : memref<38xf32, #tpu.memory_space<smem>>
    %131 = vector.broadcast %130 : f32 to vector<2x256xf32>
    %132 = arith.mulf %131, %129 : vector<2x256xf32>
    %133 = arith.addf %128, %132 : vector<2x256xf32>
    %c0_35 = arith.constant 0 : index
    %c512_36 = arith.constant 512 : index
    %134 = vector.load %arg2[%c0_35, %c512_36] : memref<2x1024xf32, #tpu.memory_space<vmem>>, vector<2x256xf32>
    %c2_37 = arith.constant 2 : index
    %135 = memref.load %arg1[%c2_37] : memref<38xf32, #tpu.memory_space<smem>>
    %136 = vector.broadcast %135 : f32 to vector<2x256xf32>
    %137 = arith.mulf %136, %134 : vector<2x256xf32>
    %138 = arith.addf %133, %137 : vector<2x256xf32>
    %c0_38 = arith.constant 0 : index
    %c768_39 = arith.constant 768 : index
    %139 = vector.load %arg2[%c0_38, %c768_39] : memref<2x1024xf32, #tpu.memory_space<vmem>>, vector<2x256xf32>
    %c3_40 = arith.constant 3 : index
    %140 = memref.load %arg1[%c3_40] : memref<38xf32, #tpu.memory_space<smem>>
    %141 = vector.broadcast %140 : f32 to vector<2x256xf32>
    %142 = arith.mulf %141, %139 : vector<2x256xf32>
    %143 = arith.addf %138, %142 : vector<2x256xf32>
    %cst_41 = arith.constant 0.000000e+00 : f32
    %cst_42 = arith.constant 6.000000e+00 : f32
    %144 = vector.broadcast %cst_41 : f32 to vector<2x256xf32>
    %145 = arith.maximumf %144, %143 : vector<2x256xf32>
    %146 = vector.broadcast %cst_42 : f32 to vector<2x256xf32>
    %147 = arith.minimumf %146, %145 : vector<2x256xf32>
    %c0_43 = arith.constant 0 : index
    %c0_44 = arith.constant 0 : index
    %148 = vector.load %arg4[%c0_43, %c0_44] : memref<2x1024xf32, #tpu.memory_space<vmem>>, vector<2x256xf32>
    tpu.vector_store %arg4[%c0_43, %c0_44], %147 {strides = array<i32>} : memref<2x1024xf32, #tpu.memory_space<vmem>>, vector<2x256xf32>,
    %c25 = arith.constant 25 : index
    %149 = memref.load %arg1[%c25] : memref<38xf32, #tpu.memory_space<smem>>
    %c17 = arith.constant 17 : index
    %150 = memref.load %arg1[%c17] : memref<38xf32, #tpu.memory_space<smem>>
    %151 = vector.broadcast %150 : f32 to vector<2x256xf32>
    %152 = arith.mulf %151, %70 : vector<2x256xf32>
    %153 = vector.broadcast %149 : f32 to vector<2x256xf32>
    %154 = arith.addf %153, %152 : vector<2x256xf32>
    %c21 = arith.constant 21 : index
    %155 = memref.load %arg1[%c21] : memref<38xf32, #tpu.memory_space<smem>>
    %156 = vector.broadcast %155 : f32 to vector<2x256xf32>
    %157 = arith.mulf %156, %113 : vector<2x256xf32>
    %158 = arith.addf %154, %157 : vector<2x256xf32>
    %c0_45 = arith.constant 0 : index
    %c0_46 = arith.constant 0 : index
    %159 = vector.load %arg2[%c0_45, %c0_46] : memref<2x1024xf32, #tpu.memory_space<vmem>>, vector<2x256xf32>
    %c4_47 = arith.constant 4 : index
    %160 = memref.load %arg1[%c4_47] : memref<38xf32, #tpu.memory_space<smem>>
    %161 = vector.broadcast %160 : f32 to vector<2x256xf32>
    %162 = arith.mulf %161, %159 : vector<2x256xf32>
    %163 = arith.addf %158, %162 : vector<2x256xf32>
    %c0_48 = arith.constant 0 : index
    %c256_49 = arith.constant 256 : index
    %164 = vector.load %arg2[%c0_48, %c256_49] : memref<2x1024xf32, #tpu.memory_space<vmem>>, vector<2x256xf32>
    %c5_50 = arith.constant 5 : index
    %165 = memref.load %arg1[%c5_50] : memref<38xf32, #tpu.memory_space<smem>>
    %166 = vector.broadcast %165 : f32 to vector<2x256xf32>
    %167 = arith.mulf %166, %164 : vector<2x256xf32>
    %168 = arith.addf %163, %167 : vector<2x256xf32>
    %c0_51 = arith.constant 0 : index
    %c512_52 = arith.constant 512 : index
    %169 = vector.load %arg2[%c0_51, %c512_52] : memref<2x1024xf32, #tpu.memory_space<vmem>>, vector<2x256xf32>
    %c6_53 = arith.constant 6 : index
    %170 = memref.load %arg1[%c6_53] : memref<38xf32, #tpu.memory_space<smem>>
    %171 = vector.broadcast %170 : f32 to vector<2x256xf32>
    %172 = arith.mulf %171, %169 : vector<2x256xf32>
    %173 = arith.addf %168, %172 : vector<2x256xf32>
    %c0_54 = arith.constant 0 : index
    %c768_55 = arith.constant 768 : index
    %174 = vector.load %arg2[%c0_54, %c768_55] : memref<2x1024xf32, #tpu.memory_space<vmem>>, vector<2x256xf32>
    %c7_56 = arith.constant 7 : index
    %175 = memref.load %arg1[%c7_56] : memref<38xf32, #tpu.memory_space<smem>>
    %176 = vector.broadcast %175 : f32 to vector<2x256xf32>
    %177 = arith.mulf %176, %174 : vector<2x256xf32>
    %178 = arith.addf %173, %177 : vector<2x256xf32>
    %cst_57 = arith.constant 0.000000e+00 : f32
    %cst_58 = arith.constant 6.000000e+00 : f32
    %179 = vector.broadcast %cst_57 : f32 to vector<2x256xf32>
    %180 = arith.maximumf %179, %178 : vector<2x256xf32>
    %181 = vector.broadcast %cst_58 : f32 to vector<2x256xf32>
    %182 = arith.minimumf %181, %180 : vector<2x256xf32>
    %c0_59 = arith.constant 0 : index
    %c256_60 = arith.constant 256 : index
    %183 = vector.load %arg4[%c0_59, %c256_60] : memref<2x1024xf32, #tpu.memory_space<vmem>>, vector<2x256xf32>
    tpu.vector_store %arg4[%c0_59, %c256_60], %182 {strides = array<i32>} : memref<2x1024xf32, #tpu.memory_space<vmem>>, vector<2x256xf32>,
    %c26 = arith.constant 26 : index
    %184 = memref.load %arg1[%c26] : memref<38xf32, #tpu.memory_space<smem>>
    %c18 = arith.constant 18 : index
    %185 = memref.load %arg1[%c18] : memref<38xf32, #tpu.memory_space<smem>>
    %186 = vector.broadcast %185 : f32 to vector<2x256xf32>
    %187 = arith.mulf %186, %70 : vector<2x256xf32>
    %188 = vector.broadcast %184 : f32 to vector<2x256xf32>
    %189 = arith.addf %188, %187 : vector<2x256xf32>
    %c22 = arith.constant 22 : index
    %190 = memref.load %arg1[%c22] : memref<38xf32, #tpu.memory_space<smem>>
    %191 = vector.broadcast %190 : f32 to vector<2x256xf32>
    %192 = arith.mulf %191, %113 : vector<2x256xf32>
    %193 = arith.addf %189, %192 : vector<2x256xf32>
    %c0_61 = arith.constant 0 : index
    %c0_62 = arith.constant 0 : index
    %194 = vector.load %arg2[%c0_61, %c0_62] : memref<2x1024xf32, #tpu.memory_space<vmem>>, vector<2x256xf32>
    %c8 = arith.constant 8 : index
    %195 = memref.load %arg1[%c8] : memref<38xf32, #tpu.memory_space<smem>>
    %196 = vector.broadcast %195 : f32 to vector<2x256xf32>
    %197 = arith.mulf %196, %194 : vector<2x256xf32>
    %198 = arith.addf %193, %197 : vector<2x256xf32>
    %c0_63 = arith.constant 0 : index
    %c256_64 = arith.constant 256 : index
    %199 = vector.load %arg2[%c0_63, %c256_64] : memref<2x1024xf32, #tpu.memory_space<vmem>>, vector<2x256xf32>
    %c9 = arith.constant 9 : index
    %200 = memref.load %arg1[%c9] : memref<38xf32, #tpu.memory_space<smem>>
    %201 = vector.broadcast %200 : f32 to vector<2x256xf32>
    %202 = arith.mulf %201, %199 : vector<2x256xf32>
    %203 = arith.addf %198, %202 : vector<2x256xf32>
    %c0_65 = arith.constant 0 : index
    %c512_66 = arith.constant 512 : index
    %204 = vector.load %arg2[%c0_65, %c512_66] : memref<2x1024xf32, #tpu.memory_space<vmem>>, vector<2x256xf32>
    %c10 = arith.constant 10 : index
    %205 = memref.load %arg1[%c10] : memref<38xf32, #tpu.memory_space<smem>>
    %206 = vector.broadcast %205 : f32 to vector<2x256xf32>
    %207 = arith.mulf %206, %204 : vector<2x256xf32>
    %208 = arith.addf %203, %207 : vector<2x256xf32>
    %c0_67 = arith.constant 0 : index
    %c768_68 = arith.constant 768 : index
    %209 = vector.load %arg2[%c0_67, %c768_68] : memref<2x1024xf32, #tpu.memory_space<vmem>>, vector<2x256xf32>
    %c11 = arith.constant 11 : index
    %210 = memref.load %arg1[%c11] : memref<38xf32, #tpu.memory_space<smem>>
    %211 = vector.broadcast %210 : f32 to vector<2x256xf32>
    %212 = arith.mulf %211, %209 : vector<2x256xf32>
    %213 = arith.addf %208, %212 : vector<2x256xf32>
    %cst_69 = arith.constant 0.000000e+00 : f32
    %cst_70 = arith.constant 6.000000e+00 : f32
    %214 = vector.broadcast %cst_69 : f32 to vector<2x256xf32>
    %215 = arith.maximumf %214, %213 : vector<2x256xf32>
    %216 = vector.broadcast %cst_70 : f32 to vector<2x256xf32>
    %217 = arith.minimumf %216, %215 : vector<2x256xf32>
    %c0_71 = arith.constant 0 : index
    %c512_72 = arith.constant 512 : index
    %218 = vector.load %arg4[%c0_71, %c512_72] : memref<2x1024xf32, #tpu.memory_space<vmem>>, vector<2x256xf32>
    tpu.vector_store %arg4[%c0_71, %c512_72], %217 {strides = array<i32>} : memref<2x1024xf32, #tpu.memory_space<vmem>>, vector<2x256xf32>,
    %c27 = arith.constant 27 : index
    %219 = memref.load %arg1[%c27] : memref<38xf32, #tpu.memory_space<smem>>
    %c19 = arith.constant 19 : index
    %220 = memref.load %arg1[%c19] : memref<38xf32, #tpu.memory_space<smem>>
    %221 = vector.broadcast %220 : f32 to vector<2x256xf32>
    %222 = arith.mulf %221, %70 : vector<2x256xf32>
    %223 = vector.broadcast %219 : f32 to vector<2x256xf32>
    %224 = arith.addf %223, %222 : vector<2x256xf32>
    %c23 = arith.constant 23 : index
    %225 = memref.load %arg1[%c23] : memref<38xf32, #tpu.memory_space<smem>>
    %226 = vector.broadcast %225 : f32 to vector<2x256xf32>
    %227 = arith.mulf %226, %113 : vector<2x256xf32>
    %228 = arith.addf %224, %227 : vector<2x256xf32>
    %c0_73 = arith.constant 0 : index
    %c0_74 = arith.constant 0 : index
    %229 = vector.load %arg2[%c0_73, %c0_74] : memref<2x1024xf32, #tpu.memory_space<vmem>>, vector<2x256xf32>
    %c12 = arith.constant 12 : index
    %230 = memref.load %arg1[%c12] : memref<38xf32, #tpu.memory_space<smem>>
    %231 = vector.broadcast %230 : f32 to vector<2x256xf32>
    %232 = arith.mulf %231, %229 : vector<2x256xf32>
    %233 = arith.addf %228, %232 : vector<2x256xf32>
    %c0_75 = arith.constant 0 : index
    %c256_76 = arith.constant 256 : index
    %234 = vector.load %arg2[%c0_75, %c256_76] : memref<2x1024xf32, #tpu.memory_space<vmem>>, vector<2x256xf32>
    %c13 = arith.constant 13 : index
    %235 = memref.load %arg1[%c13] : memref<38xf32, #tpu.memory_space<smem>>
    %236 = vector.broadcast %235 : f32 to vector<2x256xf32>
    %237 = arith.mulf %236, %234 : vector<2x256xf32>
    %238 = arith.addf %233, %237 : vector<2x256xf32>
    %c0_77 = arith.constant 0 : index
    %c512_78 = arith.constant 512 : index
    %239 = vector.load %arg2[%c0_77, %c512_78] : memref<2x1024xf32, #tpu.memory_space<vmem>>, vector<2x256xf32>
    %c14 = arith.constant 14 : index
    %240 = memref.load %arg1[%c14] : memref<38xf32, #tpu.memory_space<smem>>
    %241 = vector.broadcast %240 : f32 to vector<2x256xf32>
    %242 = arith.mulf %241, %239 : vector<2x256xf32>
    %243 = arith.addf %238, %242 : vector<2x256xf32>
    %c0_79 = arith.constant 0 : index
    %c768_80 = arith.constant 768 : index
    %244 = vector.load %arg2[%c0_79, %c768_80] : memref<2x1024xf32, #tpu.memory_space<vmem>>, vector<2x256xf32>
    %c15 = arith.constant 15 : index
    %245 = memref.load %arg1[%c15] : memref<38xf32, #tpu.memory_space<smem>>
    %246 = vector.broadcast %245 : f32 to vector<2x256xf32>
    %247 = arith.mulf %246, %244 : vector<2x256xf32>
    %248 = arith.addf %243, %247 : vector<2x256xf32>
    %cst_81 = arith.constant 0.000000e+00 : f32
    %cst_82 = arith.constant 6.000000e+00 : f32
    %249 = vector.broadcast %cst_81 : f32 to vector<2x256xf32>
    %250 = arith.maximumf %249, %248 : vector<2x256xf32>
    %251 = vector.broadcast %cst_82 : f32 to vector<2x256xf32>
    %252 = arith.minimumf %251, %250 : vector<2x256xf32>
    %c0_83 = arith.constant 0 : index
    %c768_84 = arith.constant 768 : index
    %253 = vector.load %arg4[%c0_83, %c768_84] : memref<2x1024xf32, #tpu.memory_space<vmem>>, vector<2x256xf32>
    tpu.vector_store %arg4[%c0_83, %c768_84], %252 {strides = array<i32>} : memref<2x1024xf32, #tpu.memory_space<vmem>>, vector<2x256xf32>,
    return
  }
  func.func @transform_0(%arg0: i32) -> i32 {
    %c0_i32 = arith.constant 0 : i32
    %c0_i32_0 = arith.constant 0 : i32
    return %c0_i32 : i32
  }
  func.func @transform_1(%arg0: i32) -> (i32, i32) {
    %c0_i32 = arith.constant 0 : i32
    %c0_i32_0 = arith.constant 0 : i32
    return %arg0, %c0_i32 : i32, i32
  }
  func.func @transform_2(%arg0: i32) -> (i32, i32) {
    %c0_i32 = arith.constant 0 : i32
    %c0_i32_0 = arith.constant 0 : i32
    %c0_i32_1 = arith.constant 0 : i32
    return %c0_i32, %c0_i32_0 : i32, i32
  }
  func.func @transform_3(%arg0: i32) -> (i32, i32) {
    %c0_i32 = arith.constant 0 : i32
    %c0_i32_0 = arith.constant 0 : i32
    return %arg0, %c0_i32 : i32, i32
  }
}

</mosaic_0001>

<llo_original>
// kernel: tpu_custom_call.1
$region0: #{tpu_custom_call.1}
  #allocation0 [shape = 'u32[]', space=smem, size = 0x4, offset = 0x4, fixed_abs, tag = 'smem constant byte address 0x4 - core index']
  #allocation1 [shape = 'u32[144,128]{1,0:T(1,128)}', space=vmem, size = 0x12000, scoped, tag = 'internal scratch']
  %s0 = inlined_call_operand.hbm [shape: f32[38], index: 0, kind: input, shape index: {}]
  %s1 = inlined_call_operand.hbm [shape: f32[2,1024], index: 1, kind: input, shape index: {}]
  %s2 = inlined_call_operand.hbm [shape: f32[8,256], index: 2, kind: input, shape index: {}]
  %s3 = inlined_call_operand.hbm [shape: f32[2,1024], index: 3, kind: output, shape index: {}]
  %s4 = sld [smem:[#allocation0]]
  $region34: #{tpu_custom_call.1} parent=0
    _
  %s6 = ssub.s32 1, %s4
  %s7 = scalar_select 0, %s6, %s4
  $region1: #{tpu_custom_call.1} parent=0
    #allocation2 [shape = 'u8[512]{0}', space=smem, size = 0x200, scoped, tag = 'input window, operand 0, single buffered']
    #allocation3 [shape = 's32[1]{0}', space=sflag, size = 0x4, scoped, tag = 'scoped memory for tpu_custom_call.1']
    #allocation4 [shape = 's32[1]{0}', space=sflag, size = 0x4, scoped, tag = 'scoped memory for tpu_custom_call.1']
    #allocation5 [shape = 's32[1]{0}', space=sflag, size = 0x4, scoped, tag = 'scoped memory for tpu_custom_call.1']
    #allocation6 [shape = 'u8[8192]{0}', space=vmem, size = 0x2000, scoped, tag = 'input window, operand 1, single buffered']
    #allocation7 [shape = 'u8[8192]{0}', space=vmem, size = 0x2000, scoped, tag = 'input window, operand 2, single buffered']
    #allocation8 [shape = 's32[1]{0}', space=sflag, size = 0x4, scoped, tag = 'scoped memory for tpu_custom_call.1']
    #allocation9 [shape = 'u8[8192]{0}', space=vmem, size = 0x2000, scoped, tag = 'output window, operand 0, single buffered']
    %8 = vsyncpa [#allocation5], 0
    %9 = vsyncpa [#allocation3], 0
    %10 = vsyncpa [#allocation8], 0
    %11 = vsyncpa [#allocation4], 0
    // Predicated region
    $region2: #{tpu_custom_call.1} parent=1 // pred_check
      _
    $region3: #{tpu_custom_call.1} parent=1 // pred_check_branch
      %13 = sbr.rel (0) target = $region5
    $region4: #{tpu_custom_call.1} parent=1 // pred_region
      %s15 = ssub.s32 16, 16
      %16 = vsyncadd [#allocation5], %s15
      %19 = dma.hbm_to_smem %s0, 16, [#allocation2], [#allocation5]
    $region5: #{tpu_custom_call.1} parent=1 // pred_fallthru
      _
    // Predicated region
    $region6: #{tpu_custom_call.1} parent=1 // pred_check
      _
    $region7: #{tpu_custom_call.1} parent=1 // pred_check_branch
      %21 = sbr.rel (0) target = $region9
    $region8: #{tpu_custom_call.1} parent=1 // pred_region
      %s23 = ssub.s32 256, 256
      %24 = vsyncadd [#allocation3], %s23
      %s26 = sshll.u32 [#allocation6], 4
      %s27 = int_to_ptr.vmem [resolvable:$true] %s26
      %29 = dma.hbm_to_vmem [thread:$0]  %s1, 256, %s27, [#allocation3]
    $region9: #{tpu_custom_call.1} parent=1 // pred_fallthru
      _
    // Predicated region
    $region10: #{tpu_custom_call.1} parent=1 // pred_check
      _
    $region11: #{tpu_custom_call.1} parent=1 // pred_check_branch
      %31 = sbr.rel (0) target = $region13
    $region12: #{tpu_custom_call.1} parent=1 // pred_region
      %s33 = ssub.s32 256, 256
      %34 = vsyncadd [#allocation8], %s33
      %s36 = sshll.u32 [#allocation7], 4
      %s37 = int_to_ptr.vmem [resolvable:$true] %s36
      %39 = dma.hbm_to_vmem [thread:$0]  %s2, 256, %s37, [#allocation8]
    $region13: #{tpu_custom_call.1} parent=1 // pred_fallthru
      _
    // Predicated region
    $region14: #{tpu_custom_call.1} parent=1 // pred_check
      _
    $region15: #{tpu_custom_call.1} parent=1 // pred_check_branch
      %41 = sbr.rel (0) target = $region17
    $region16: #{tpu_custom_call.1} parent=1 // pred_region
      %42 = dma.done [#allocation5], 16
    $region17: #{tpu_custom_call.1} parent=1 // pred_fallthru
      _
    // Predicated region
    $region18: #{tpu_custom_call.1} parent=1 // pred_check
      _
    $region19: #{tpu_custom_call.1} parent=1 // pred_check_branch
      %44 = sbr.rel (0) target = $region21
    $region20: #{tpu_custom_call.1} parent=1 // pred_region
      %45 = dma.done [#allocation3], 256
    $region21: #{tpu_custom_call.1} parent=1 // pred_fallthru
      _
    // Predicated region
    $region22: #{tpu_custom_call.1} parent=1 // pred_check
      _
    $region23: #{tpu_custom_call.1} parent=1 // pred_check_branch
      %47 = sbr.rel (0) target = $region25
    $region24: #{tpu_custom_call.1} parent=1 // pred_region
      %48 = dma.done [#allocation8], 256
    $region25: #{tpu_custom_call.1} parent=1 // pred_fallthru
      _
    %49 = sfence
    %v50 = vld [vmem:[#allocation6] sm:$0xf]
    %v53 = vunpack.c.l.s4 1983009808
    %v54 = vunpack.c.0.s8 %v53
    %v55 = vlaneseq
    %v56 = vshrl.u32 %v55, 7
    %v57 = vsub.s32 %v54, %v56
    %v58 = vrot.slane %v50, %v57
    %v59 = vcombine.high %v58, %v58
    %vm62 = vcmask 1041408
    %v63 = vsel %vm62, %v58, 0.0
    %v64 = vsel %vm62, %v59, 0.0
    %v65 = vadd.f32 %v63, %v64
    %66 = vadd.xlane.f32.xlu0 %v65
    %v67 = vpop.xlane.xlu0 %66
    %v68 = vsel %vm62, %v58, -inf
    %v69 = vsel %vm62, %v59, -inf
    %v70 = vmax.f32 %v68, %v69
    %71 = vmax.xlane.f32.xlu0 %v70
    %v72 = vpop.xlane.xlu0 %71
    %v73 = vld [vmem:[#allocation6 + $0x4] sm:$0xf]
    %v76 = vunpack.c.l.s4 1983009808
    %v77 = vunpack.c.0.s8 %v76
    %v78 = vlaneseq
    %v79 = vshrl.u32 %v78, 7
    %v80 = vsub.s32 %v77, %v79
    %v81 = vrot.slane %v73, %v80
    %v82 = vcombine.high %v81, %v81
    %v85 = vsel %vm62, %v81, 0.0
    %v86 = vsel %vm62, %v82, 0.0
    %v87 = vadd.f32 %v85, %v86
    %88 = vadd.xlane.f32.xlu0 %v87
    %v89 = vpop.xlane.xlu0 %88
    %v90 = vsel %vm62, %v81, -inf
    %v91 = vsel %vm62, %v82, -inf
    %v92 = vmax.f32 %v90, %v91
    %93 = vmax.xlane.f32.xlu0 %v92
    %v94 = vpop.xlane.xlu0 %93
    %v95 = vadd.f32 %v67, %v89
    %v96 = vmax.f32 %v72, %v94
    %v97 = vld [vmem:[#allocation6 + $0x8] sm:$0xf]
    %v100 = vunpack.c.l.s4 1983009808
    %v101 = vunpack.c.0.s8 %v100
    %v102 = vlaneseq
    %v103 = vshrl.u32 %v102, 7
    %v104 = vsub.s32 %v101, %v103
    %v105 = vrot.slane %v97, %v104
    %v106 = vcombine.high %v105, %v105
    %v109 = vsel %vm62, %v105, 0.0
    %v110 = vsel %vm62, %v106, 0.0
    %v111 = vadd.f32 %v109, %v110
    %112 = vadd.xlane.f32.xlu0 %v111
    %v113 = vpop.xlane.xlu0 %112
    %v114 = vsel %vm62, %v105, -inf
    %v115 = vsel %vm62, %v106, -inf
    %v116 = vmax.f32 %v114, %v115
    %117 = vmax.xlane.f32.xlu0 %v116
    %v118 = vpop.xlane.xlu0 %117
    %v119 = vadd.f32 %v95, %v113
    %v120 = vmax.f32 %v96, %v118
    %v121 = vld [vmem:[#allocation6 + $0xc] sm:$0xf]
    %v124 = vunpack.c.l.s4 1983009808
    %v125 = vunpack.c.0.s8 %v124
    %v126 = vlaneseq
    %v127 = vshrl.u32 %v126, 7
    %v128 = vsub.s32 %v125, %v127
    %v129 = vrot.slane %v121, %v128
    %v130 = vcombine.high %v129, %v129
    %v133 = vsel %vm62, %v129, 0.0
    %v134 = vsel %vm62, %v130, 0.0
    %v135 = vadd.f32 %v133, %v134
    %136 = vadd.xlane.f32.xlu0 %v135
    %v137 = vpop.xlane.xlu0 %136
    %v138 = vsel %vm62, %v129, -inf
    %v139 = vsel %vm62, %v130, -inf
    %v140 = vmax.f32 %v138, %v139
    %141 = vmax.xlane.f32.xlu0 %v140
    %v142 = vpop.xlane.xlu0 %141
    %v143 = vadd.f32 %v119, %v137
    %v144 = vmax.f32 %v120, %v142
    %v145 = vmul.f32 %v143, 0.0009765625
    %v146 = vld [vmem:[#allocation7] ss:$8 sm:$0x3]
    %s147 = scalar_lea.vmem [#allocation7], 1
    %v148 = vld [vmem:[%s147] ss:$8 sm:$0x3]
    %s149 = scalar_lea.vmem [#allocation7], 2
    %v150 = vld [vmem:[%s149] ss:$8 sm:$0x3]
    %s151 = scalar_lea.vmem [#allocation7], 3
    %v152 = vld [vmem:[%s151] ss:$8 sm:$0x3]
    %s153 = sld [smem:[#allocation2 + $0x1c]]
    %s154 = sld [smem:[#allocation2 + $0x1d]]
    %s155 = sld [smem:[#allocation2 + $0x1e]]
    %s156 = sld [smem:[#allocation2 + $0x1f]]
    %s157 = sld [smem:[#allocation2 + $0x20]]
    %v158 = vstv %s153
    %v159 = vmul.f32 %v145, %v158
    %v160 = vstv %s154
    %v161 = vadd.f32 %v159, %v160
    %v162 = vmul.f32 %v145, %v145
    %v163 = vstv %s155
    %v164 = vmul.f32 %v162, %v163
    %v165 = vmul.f32 %v145, 2.0
    %v166 = vstv %s156
    %v167 = vmul.f32 %v165, %v166
    %v168 = vadd.f32 %v164, %v167
    %v169 = vstv %s157
    %v170 = vadd.f32 %v168, %v169
    %v171 = vadd.f32 %v170, 1e-05
    %v172 = vrsqrt.pop %v171
    %v174 = vlaneseq
    %v175 = vshrl.u32 %v174, 7
    %v176 = vsub.s32 0, %v175
    %v177 = vrot.slane %v146, %v176
    %v178 = vlaneseq
    %v179 = vshrl.u32 %v178, 7
    %v180 = vsub.s32 1, %v179
    %v181 = vrot.slane %v146, %v180
    %v184 = vmul.f32 %v145, %v177
    %v185 = vmul.f32 %v145, %v181
    %v187 = vlaneseq
    %v188 = vshrl.u32 %v187, 7
    %v189 = vsub.s32 0, %v188
    %v190 = vrot.slane %v148, %v189
    %v191 = vlaneseq
    %v192 = vshrl.u32 %v191, 7
    %v193 = vsub.s32 1, %v192
    %v194 = vrot.slane %v148, %v193
    %v197 = vadd.f32 %v184, %v190
    %v198 = vadd.f32 %v185, %v194
    %v199 = vsub.f32 %v197, %v161
    %v200 = vsub.f32 %v198, %v161
    %v201 = vmul.f32 %v199, %v172
    %v202 = vmul.f32 %v200, %v172
    %v204 = vlaneseq
    %v205 = vshrl.u32 %v204, 7
    %v206 = vsub.s32 0, %v205
    %v207 = vrot.slane %v150, %v206
    %v208 = vlaneseq
    %v209 = vshrl.u32 %v208, 7
    %v210 = vsub.s32 1, %v209
    %v211 = vrot.slane %v150, %v210
    %v214 = vmul.f32 %v201, %v207
    %v215 = vmul.f32 %v202, %v211
    %v217 = vlaneseq
    %v218 = vshrl.u32 %v217, 7
    %v219 = vsub.s32 0, %v218
    %v220 = vrot.slane %v152, %v219
    %v221 = vlaneseq
    %v222 = vshrl.u32 %v221, 7
    %v223 = vsub.s32 1, %v222
    %v224 = vrot.slane %v152, %v223
    %v227 = vadd.f32 %v214, %v220
    %v228 = vadd.f32 %v215, %v224
    %v229 = vmax.f32 %v227, 0.0
    %v230 = vmax.f32 %v228, 0.0
    %v231 = vmin.f32 %v229, 6.0
    %v232 = vmin.f32 %v230, 6.0
    %s233 = scalar_lea.vmem [#allocation7], 4
    %v234 = vld [vmem:[%s233] ss:$8 sm:$0x3]
    %s235 = scalar_lea.vmem [#allocation7], 5
    %v236 = vld [vmem:[%s235] ss:$8 sm:$0x3]
    %s237 = scalar_lea.vmem [#allocation7], 6
    %v238 = vld [vmem:[%s237] ss:$8 sm:$0x3]
    %s239 = scalar_lea.vmem [#allocation7], 7
    %v240 = vld [vmem:[%s239] ss:$8 sm:$0x3]
    %s241 = sld [smem:[#allocation2 + $0x21]]
    %s242 = sld [smem:[#allocation2 + $0x22]]
    %s243 = sld [smem:[#allocation2 + $0x23]]
    %s244 = sld [smem:[#allocation2 + $0x24]]
    %s245 = sld [smem:[#allocation2 + $0x25]]
    %v246 = vstv %s241
    %v247 = vmul.f32 %v144, %v246
    %v248 = vstv %s242
    %v249 = vadd.f32 %v247, %v248
    %v250 = vmul.f32 %v144, %v144
    %v251 = vstv %s243
    %v252 = vmul.f32 %v250, %v251
    %v253 = vmul.f32 %v144, 2.0
    %v254 = vstv %s244
    %v255 = vmul.f32 %v253, %v254
    %v256 = vadd.f32 %v252, %v255
    %v257 = vstv %s245
    %v258 = vadd.f32 %v256, %v257
    %v259 = vadd.f32 %v258, 1e-05
    %v260 = vrsqrt.pop %v259
    %v262 = vlaneseq
    %v263 = vshrl.u32 %v262, 7
    %v264 = vsub.s32 0, %v263
    %v265 = vrot.slane %v234, %v264
    %v266 = vlaneseq
    %v267 = vshrl.u32 %v266, 7
    %v268 = vsub.s32 1, %v267
    %v269 = vrot.slane %v234, %v268
    %v272 = vmul.f32 %v144, %v265
    %v273 = vmul.f32 %v144, %v269
    %v275 = vlaneseq
    %v276 = vshrl.u32 %v275, 7
    %v277 = vsub.s32 0, %v276
    %v278 = vrot.slane %v236, %v277
    %v279 = vlaneseq
    %v280 = vshrl.u32 %v279, 7
    %v281 = vsub.s32 1, %v280
    %v282 = vrot.slane %v236, %v281
    %v285 = vadd.f32 %v272, %v278
    %v286 = vadd.f32 %v273, %v282
    %v287 = vsub.f32 %v285, %v249
    %v288 = vsub.f32 %v286, %v249
    %v289 = vmul.f32 %v287, %v260
    %v290 = vmul.f32 %v288, %v260
    %v292 = vlaneseq
    %v293 = vshrl.u32 %v292, 7
    %v294 = vsub.s32 0, %v293
    %v295 = vrot.slane %v238, %v294
    %v296 = vlaneseq
    %v297 = vshrl.u32 %v296, 7
    %v298 = vsub.s32 1, %v297
    %v299 = vrot.slane %v238, %v298
    %v302 = vmul.f32 %v289, %v295
    %v303 = vmul.f32 %v290, %v299
    %v305 = vlaneseq
    %v306 = vshrl.u32 %v305, 7
    %v307 = vsub.s32 0, %v306
    %v308 = vrot.slane %v240, %v307
    %v309 = vlaneseq
    %v310 = vshrl.u32 %v309, 7
    %v311 = vsub.s32 1, %v310
    %v312 = vrot.slane %v240, %v311
    %v315 = vadd.f32 %v302, %v308
    %v316 = vadd.f32 %v303, %v312
    %v317 = vmax.f32 %v315, 0.0
    %v318 = vmax.f32 %v316, 0.0
    %v319 = vmin.f32 %v317, 6.0
    %v320 = vmin.f32 %v318, 6.0
    %s321 = sld [smem:[#allocation2 + $0x18]]
    %s322 = sld [smem:[#allocation2 + $0x10]]
    %v323 = vstv %s322
    %v324 = vmul.f32 %v323, %v231
    %v325 = vmul.f32 %v323, %v232
    %v326 = vstv %s321
    %v327 = vadd.f32 %v326, %v324
    %v328 = vadd.f32 %v326, %v325
    %s329 = sld [smem:[#allocation2 + $0x14]]
    %v330 = vstv %s329
    %v331 = vmul.f32 %v330, %v319
    %v332 = vmul.f32 %v330, %v320
    %v333 = vadd.f32 %v327, %v331
    %v334 = vadd.f32 %v328, %v332
    %s335 = sld [smem:[#allocation2]]
    %v336 = vstv %s335
    %v337 = vmul.f32 %v336, %v50
    %v340 = vunpack.c.l.s4 1983009808
    %v341 = vunpack.c.0.s8 %v340
    %v342 = vlaneseq
    %v343 = vshrl.u32 %v342, 7
    %v344 = vsub.s32 %v341, %v343
    %v345 = vrot.slane %v337, %v344
    %v346 = vcombine.high %v345, %v345
    %v349 = vadd.f32 %v333, %v345
    %v350 = vadd.f32 %v334, %v346
    %s351 = sld [smem:[#allocation2 + $0x1]]
    %v352 = vstv %s351
    %v353 = vmul.f32 %v352, %v73
    %v356 = vunpack.c.l.s4 1983009808
    %v357 = vunpack.c.0.s8 %v356
    %v358 = vlaneseq
    %v359 = vshrl.u32 %v358, 7
    %v360 = vsub.s32 %v357, %v359
    %v361 = vrot.slane %v353, %v360
    %v362 = vcombine.high %v361, %v361
    %v365 = vadd.f32 %v349, %v361
    %v366 = vadd.f32 %v350, %v362
    %s367 = sld [smem:[#allocation2 + $0x2]]
    %v368 = vstv %s367
    %v369 = vmul.f32 %v368, %v97
    %v372 = vunpack.c.l.s4 1983009808
    %v373 = vunpack.c.0.s8 %v372
    %v374 = vlaneseq
    %v375 = vshrl.u32 %v374, 7
    %v376 = vsub.s32 %v373, %v375
    %v377 = vrot.slane %v369, %v376
    %v378 = vcombine.high %v377, %v377
    %v381 = vadd.f32 %v365, %v377
    %v382 = vadd.f32 %v366, %v378
    %s383 = sld [smem:[#allocation2 + $0x3]]
    %v384 = vstv %s383
    %v385 = vmul.f32 %v384, %v121
    %v388 = vunpack.c.l.s4 1983009808
    %v389 = vunpack.c.0.s8 %v388
    %v390 = vlaneseq
    %v391 = vshrl.u32 %v390, 7
    %v392 = vsub.s32 %v389, %v391
    %v393 = vrot.slane %v385, %v392
    %v394 = vcombine.high %v393, %v393
    %v397 = vadd.f32 %v381, %v393
    %v398 = vadd.f32 %v382, %v394
    %v399 = vmax.f32 %v397, 0.0
    %v400 = vmax.f32 %v398, 0.0
    %v401 = vmin.f32 %v399, 6.0
    %v402 = vmin.f32 %v400, 6.0
    %v405 = vcombine.low %v401, %v402
    %v407 = vunpack.c.l.s4 1983009808
    %v408 = vunpack.c.0.s8 %v407
    %v409 = vlaneseq
    %v410 = vshrl.u32 %v409, 7
    %v411 = vsub.s32 %v408, %v410
    %v412 = vrot.slane %v405, %v411
    %414 = vst [vmem:[#allocation9] sm:$0xf] %v412
    %s415 = sld [smem:[#allocation2 + $0x19]]
    %s416 = sld [smem:[#allocation2 + $0x11]]
    %v417 = vstv %s416
    %v418 = vmul.f32 %v417, %v231
    %v419 = vmul.f32 %v417, %v232
    %v420 = vstv %s415
    %v421 = vadd.f32 %v420, %v418
    %v422 = vadd.f32 %v420, %v419
    %s423 = sld [smem:[#allocation2 + $0x15]]
    %v424 = vstv %s423
    %v425 = vmul.f32 %v424, %v319
    %v426 = vmul.f32 %v424, %v320
    %v427 = vadd.f32 %v421, %v425
    %v428 = vadd.f32 %v422, %v426
    %v429 = vld [vmem:[#allocation6] sm:$0xf]
    %s430 = sld [smem:[#allocation2 + $0x4]]
    %v431 = vstv %s430
    %v432 = vmul.f32 %v431, %v429
    %v435 = vunpack.c.l.s4 1983009808
    %v436 = vunpack.c.0.s8 %v435
    %v437 = vlaneseq
    %v438 = vshrl.u32 %v437, 7
    %v439 = vsub.s32 %v436, %v438
    %v440 = vrot.slane %v432, %v439
    %v441 = vcombine.high %v440, %v440
    %v444 = vadd.f32 %v427, %v440
    %v445 = vadd.f32 %v428, %v441
    %v446 = vld [vmem:[#allocation6 + $0x4] sm:$0xf]
    %s447 = sld [smem:[#allocation2 + $0x5]]
    %v448 = vstv %s447
    %v449 = vmul.f32 %v448, %v446
    %v452 = vunpack.c.l.s4 1983009808
    %v453 = vunpack.c.0.s8 %v452
    %v454 = vlaneseq
    %v455 = vshrl.u32 %v454, 7
    %v456 = vsub.s32 %v453, %v455
    %v457 = vrot.slane %v449, %v456
    %v458 = vcombine.high %v457, %v457
    %v461 = vadd.f32 %v444, %v457
    %v462 = vadd.f32 %v445, %v458
    %v463 = vld [vmem:[#allocation6 + $0x8] sm:$0xf]
    %s464 = sld [smem:[#allocation2 + $0x6]]
    %v465 = vstv %s464
    %v466 = vmul.f32 %v465, %v463
    %v469 = vunpack.c.l.s4 1983009808
    %v470 = vunpack.c.0.s8 %v469
    %v471 = vlaneseq
    %v472 = vshrl.u32 %v471, 7
    %v473 = vsub.s32 %v470, %v472
    %v474 = vrot.slane %v466, %v473
    %v475 = vcombine.high %v474, %v474
    %v478 = vadd.f32 %v461, %v474
    %v479 = vadd.f32 %v462, %v475
    %v480 = vld [vmem:[#allocation6 + $0xc] sm:$0xf]
    %s481 = sld [smem:[#allocation2 + $0x7]]
    %v482 = vstv %s481
    %v483 = vmul.f32 %v482, %v480
    %v486 = vunpack.c.l.s4 1983009808
    %v487 = vunpack.c.0.s8 %v486
    %v488 = vlaneseq
    %v489 = vshrl.u32 %v488, 7
    %v490 = vsub.s32 %v487, %v489
    %v491 = vrot.slane %v483, %v490
    %v492 = vcombine.high %v491, %v491
    %v495 = vadd.f32 %v478, %v491
    %v496 = vadd.f32 %v479, %v492
    %v497 = vmax.f32 %v495, 0.0
    %v498 = vmax.f32 %v496, 0.0
    %v499 = vmin.f32 %v497, 6.0
    %v500 = vmin.f32 %v498, 6.0
    %v503 = vcombine.low %v499, %v500
    %v505 = vunpack.c.l.s4 1983009808
    %v506 = vunpack.c.0.s8 %v505
    %v507 = vlaneseq
    %v508 = vshrl.u32 %v507, 7
    %v509 = vsub.s32 %v506, %v508
    %v510 = vrot.slane %v503, %v509
    %512 = vst [vmem:[#allocation9 + $0x4] sm:$0xf] %v510
    %s513 = sld [smem:[#allocation2 + $0x1a]]
    %s514 = sld [smem:[#allocation2 + $0x12]]
    %v515 = vstv %s514
    %v516 = vmul.f32 %v515, %v231
    %v517 = vmul.f32 %v515, %v232
    %v518 = vstv %s513
    %v519 = vadd.f32 %v518, %v516
    %v520 = vadd.f32 %v518, %v517
    %s521 = sld [smem:[#allocation2 + $0x16]]
    %v522 = vstv %s521
    %v523 = vmul.f32 %v522, %v319
    %v524 = vmul.f32 %v522, %v320
    %v525 = vadd.f32 %v519, %v523
    %v526 = vadd.f32 %v520, %v524
    %v527 = vld [vmem:[#allocation6] sm:$0xf]
    %s528 = sld [smem:[#allocation2 + $0x8]]
    %v529 = vstv %s528
    %v530 = vmul.f32 %v529, %v527
    %v533 = vunpack.c.l.s4 1983009808
    %v534 = vunpack.c.0.s8 %v533
    %v535 = vlaneseq
    %v536 = vshrl.u32 %v535, 7
    %v537 = vsub.s32 %v534, %v536
    %v538 = vrot.slane %v530, %v537
    %v539 = vcombine.high %v538, %v538
    %v542 = vadd.f32 %v525, %v538
    %v543 = vadd.f32 %v526, %v539
    %v544 = vld [vmem:[#allocation6 + $0x4] sm:$0xf]
    %s545 = sld [smem:[#allocation2 + $0x9]]
    %v546 = vstv %s545
    %v547 = vmul.f32 %v546, %v544
    %v550 = vunpack.c.l.s4 1983009808
    %v551 = vunpack.c.0.s8 %v550
    %v552 = vlaneseq
    %v553 = vshrl.u32 %v552, 7
    %v554 = vsub.s32 %v551, %v553
    %v555 = vrot.slane %v547, %v554
    %v556 = vcombine.high %v555, %v555
    %v559 = vadd.f32 %v542, %v555
    %v560 = vadd.f32 %v543, %v556
    %v561 = vld [vmem:[#allocation6 + $0x8] sm:$0xf]
    %s562 = sld [smem:[#allocation2 + $0xa]]
    %v563 = vstv %s562
    %v564 = vmul.f32 %v563, %v561
    %v567 = vunpack.c.l.s4 1983009808
    %v568 = vunpack.c.0.s8 %v567
    %v569 = vlaneseq
    %v570 = vshrl.u32 %v569, 7
    %v571 = vsub.s32 %v568, %v570
    %v572 = vrot.slane %v564, %v571
    %v573 = vcombine.high %v572, %v572
    %v576 = vadd.f32 %v559, %v572
    %v577 = vadd.f32 %v560, %v573
    %v578 = vld [vmem:[#allocation6 + $0xc] sm:$0xf]
    %s579 = sld [smem:[#allocation2 + $0xb]]
    %v580 = vstv %s579
    %v581 = vmul.f32 %v580, %v578
    %v584 = vunpack.c.l.s4 1983009808
    %v585 = vunpack.c.0.s8 %v584
    %v586 = vlaneseq
    %v587 = vshrl.u32 %v586, 7
    %v588 = vsub.s32 %v585, %v587
    %v589 = vrot.slane %v581, %v588
    %v590 = vcombine.high %v589, %v589
    %v593 = vadd.f32 %v576, %v589
    %v594 = vadd.f32 %v577, %v590
    %v595 = vmax.f32 %v593, 0.0
    %v596 = vmax.f32 %v594, 0.0
    %v597 = vmin.f32 %v595, 6.0
    %v598 = vmin.f32 %v596, 6.0
    %v601 = vcombine.low %v597, %v598
    %v603 = vunpack.c.l.s4 1983009808
    %v604 = vunpack.c.0.s8 %v603
    %v605 = vlaneseq
    %v606 = vshrl.u32 %v605, 7
    %v607 = vsub.s32 %v604, %v606
    %v608 = vrot.slane %v601, %v607
    %610 = vst [vmem:[#allocation9 + $0x8] sm:$0xf] %v608
    %s611 = sld [smem:[#allocation2 + $0x1b]]
    %s612 = sld [smem:[#allocation2 + $0x13]]
    %v613 = vstv %s612
    %v614 = vmul.f32 %v613, %v231
    %v615 = vmul.f32 %v613, %v232
    %v616 = vstv %s611
    %v617 = vadd.f32 %v616, %v614
    %v618 = vadd.f32 %v616, %v615
    %s619 = sld [smem:[#allocation2 + $0x17]]
    %v620 = vstv %s619
    %v621 = vmul.f32 %v620, %v319
    %v622 = vmul.f32 %v620, %v320
    %v623 = vadd.f32 %v617, %v621
    %v624 = vadd.f32 %v618, %v622
    %v625 = vld [vmem:[#allocation6] sm:$0xf]
    %s626 = sld [smem:[#allocation2 + $0xc]]
    %v627 = vstv %s626
    %v628 = vmul.f32 %v627, %v625
    %v631 = vunpack.c.l.s4 1983009808
    %v632 = vunpack.c.0.s8 %v631
    %v633 = vlaneseq
    %v634 = vshrl.u32 %v633, 7
    %v635 = vsub.s32 %v632, %v634
    %v636 = vrot.slane %v628, %v635
    %v637 = vcombine.high %v636, %v636
    %v640 = vadd.f32 %v623, %v636
    %v641 = vadd.f32 %v624, %v637
    %v642 = vld [vmem:[#allocation6 + $0x4] sm:$0xf]
    %s643 = sld [smem:[#allocation2 + $0xd]]
    %v644 = vstv %s643
    %v645 = vmul.f32 %v644, %v642
    %v648 = vunpack.c.l.s4 1983009808
    %v649 = vunpack.c.0.s8 %v648
    %v650 = vlaneseq
    %v651 = vshrl.u32 %v650, 7
    %v652 = vsub.s32 %v649, %v651
    %v653 = vrot.slane %v645, %v652
    %v654 = vcombine.high %v653, %v653
    %v657 = vadd.f32 %v640, %v653
    %v658 = vadd.f32 %v641, %v654
    %v659 = vld [vmem:[#allocation6 + $0x8] sm:$0xf]
    %s660 = sld [smem:[#allocation2 + $0xe]]
    %v661 = vstv %s660
    %v662 = vmul.f32 %v661, %v659
    %v665 = vunpack.c.l.s4 1983009808
    %v666 = vunpack.c.0.s8 %v665
    %v667 = vlaneseq
    %v668 = vshrl.u32 %v667, 7
    %v669 = vsub.s32 %v666, %v668
    %v670 = vrot.slane %v662, %v669
    %v671 = vcombine.high %v670, %v670
    %v674 = vadd.f32 %v657, %v670
    %v675 = vadd.f32 %v658, %v671
    %v676 = vld [vmem:[#allocation6 + $0xc] sm:$0xf]
    %s677 = sld [smem:[#allocation2 + $0xf]]
    %v678 = vstv %s677
    %v679 = vmul.f32 %v678, %v676
    %v682 = vunpack.c.l.s4 1983009808
    %v683 = vunpack.c.0.s8 %v682
    %v684 = vlaneseq
    %v685 = vshrl.u32 %v684, 7
    %v686 = vsub.s32 %v683, %v685
    %v687 = vrot.slane %v679, %v686
    %v688 = vcombine.high %v687, %v687
    %v691 = vadd.f32 %v674, %v687
    %v692 = vadd.f32 %v675, %v688
    %v693 = vmax.f32 %v691, 0.0
    %v694 = vmax.f32 %v692, 0.0
    %v695 = vmin.f32 %v693, 6.0
    %v696 = vmin.f32 %v694, 6.0
    %v699 = vcombine.low %v695, %v696
    %v701 = vunpack.c.l.s4 1983009808
    %v702 = vunpack.c.0.s8 %v701
    %v703 = vlaneseq
    %v704 = vshrl.u32 %v703, 7
    %v705 = vsub.s32 %v702, %v704
    %v706 = vrot.slane %v699, %v705
    %708 = vst [vmem:[#allocation9 + $0xc] sm:$0xf] %v706
    // Predicated region
    $region26: #{tpu_custom_call.1} parent=1 // pred_check
      _
    $region27: #{tpu_custom_call.1} parent=1 // pred_check_branch
      %710 = sbr.rel (0) target = $region29
    $region28: #{tpu_custom_call.1} parent=1 // pred_region
      %s712 = ssub.s32 256, 256
      %713 = vsyncadd [#allocation4], %s712
      %s715 = sshll.u32 [#allocation9], 4
      %s716 = int_to_ptr.vmem [resolvable:$true] %s715
      %718 = dma.vmem_to_hbm [thread:$0]  %s716, 256, %s3, [#allocation4]
    $region29: #{tpu_custom_call.1} parent=1 // pred_fallthru
      _
    // Predicated region
    $region30: #{tpu_custom_call.1} parent=1 // pred_check
      _
    $region31: #{tpu_custom_call.1} parent=1 // pred_check_branch
      %720 = sbr.rel (0) target = $region33
    $region32: #{tpu_custom_call.1} parent=1 // pred_region
      %721 = dma.done [#allocation4], 256
    $region33: #{tpu_custom_call.1} parent=1 // pred_fallthru
      _
    %722 = vsyncpa [#allocation3], 1
    %723 = vsyncpa [#allocation8], 1
    %724 = vsyncpa [#allocation4], 1
    %725 = vsyncpa [#allocation5], 1

</llo_original>
